<compile_context>
chip_gen: v5e
topology: v5e:2x2
jax: 0.10.0
libtpu: 0.0.40
codegen_flags: <defaults>
</compile_context>

<pallas_src>
import jax
import jax.numpy as jnp
from jax.experimental import pallas as pl
from jax.experimental.pallas import tpu as pltpu
import numpy as np


_DEFAULT_TB = 2048          # lane-dim (batch) tile; multiple of 128
_PALLAS_MIN_BATCH = 1024    # below this, plain jnp beats kernel launch/grid overhead


# ---------------------------------------------------------------------------
# Kernels (transposed [F, B] layout, lane-dense [1, B] output)
# ---------------------------------------------------------------------------
def _fused_logit_kernel(feat_ref, scale_ref, out_ref):
    # feat_ref : [F, TB]  (sparse rows then dense rows, batch on lanes)
    # scale_ref: [F, 1]   (ones for sparse rows, W for dense rows) -- resident
    out_ref[...] = jnp.sum(feat_ref[...] * scale_ref[...], axis=0, keepdims=True)


def _refine_logit_kernel(sparse_ref, refine_ref, dense_ref, w_ref, out_ref):
    # sparse_ref/refine_ref: [nS, TB], dense_ref: [D, TB], w_ref: [D, 1] (resident)
    sparse_logit = jnp.sum(sparse_ref[...] * refine_ref[...], axis=0, keepdims=True)
    dense_logit = jnp.sum(dense_ref[...] * w_ref[...], axis=0, keepdims=True)
    out_ref[...] = sparse_logit + dense_logit


# ---------------------------------------------------------------------------
# pallas_call wrappers
# ---------------------------------------------------------------------------
def _choose_tb(B, block_b):
    """Pick a lane tile: full batch if it fits one block, else a multiple of 128."""
    if B <= block_b:
        return B, B                      # single full-extent block, no padding
    tb = max(128, (block_b // 128) * 128)
    Bp = pl.cdiv(B, tb) * tb
    return tb, Bp


def _fused_logit_pallas(feat_t, scale, block_b):
    F, B = feat_t.shape
    tb, Bp = _choose_tb(B, block_b)
    if Bp != B:
        feat_t = jnp.pad(feat_t, ((0, 0), (0, Bp - B)))
    out = pl.pallas_call(
        _fused_logit_kernel,
        out_shape=jax.ShapeDtypeStruct((1, Bp), jnp.float32),
        grid=(Bp // tb,),
        in_specs=[
            pl.BlockSpec((F, tb), lambda i: (0, i)),
            pl.BlockSpec((F, 1), lambda i: (0, 0)),   # resident across the grid
        ],
        out_specs=pl.BlockSpec((1, tb), lambda i: (0, i)),
        compiler_params=pltpu.CompilerParams(
            dimension_semantics=("parallel",)),
    )(feat_t, scale)
    return out[:, :B]


def _refine_logit_pallas(sparse_t, refine_t, dense_t, weight, block_b):
    nS, B = sparse_t.shape
    D = dense_t.shape[0]
    tb, Bp = _choose_tb(B, block_b)
    if Bp != B:
        pad = ((0, 0), (0, Bp - B))
        sparse_t = jnp.pad(sparse_t, pad)
        refine_t = jnp.pad(refine_t, pad)
        dense_t = jnp.pad(dense_t, pad)
    out = pl.pallas_call(
        _refine_logit_kernel,
        out_shape=jax.ShapeDtypeStruct((1, Bp), jnp.float32),
        grid=(Bp // tb,),
        in_specs=[
            pl.BlockSpec((nS, tb), lambda i: (0, i)),
            pl.BlockSpec((nS, tb), lambda i: (0, i)),
            pl.BlockSpec((D, tb), lambda i: (0, i)),
            pl.BlockSpec((D, 1), lambda i: (0, 0)),   # resident across the grid
        ],
        out_specs=pl.BlockSpec((1, tb), lambda i: (0, i)),
        compiler_params=pltpu.CompilerParams(
            dimension_semantics=("parallel",)),
    )(sparse_t, refine_t, dense_t, weight)
    return out[:, :B]


# ---------------------------------------------------------------------------
# Module-equivalent forward (parameter/gather glue in plain JAX)
# ---------------------------------------------------------------------------
def linear_forward(X, feature_index, sparse_feats, dense_feats,
                   embedding_tables, dense_weight=None,
                   sparse_feat_refine_weight=None,
                   block_b=_DEFAULT_TB, min_pallas_batch=_PALLAS_MIN_BATCH,
                   force_pallas=False):
    B = X.shape[0]
    X = X.astype(jnp.float32)

    # sparse: gather dim-1 linear embeddings, built directly transposed [nS, B]
    sparse_rows = []
    for name in sparse_feats:
        s, _ = feature_index[name]
        ids = X[:, s].astype(jnp.int32)                      # [B]
        sparse_rows.append(embedding_tables[name][ids, 0])   # [B]
    sparse_t = jnp.stack(sparse_rows, axis=0) if sparse_rows else None

    # dense: raw value slices, transposed to [D, B] (wrapper-side glue, fused by XLA)
    dense_rows = []
    for name, _dim in dense_feats:
        s, e = feature_index[name]
        dense_rows.append(X[:, s:e].T)                       # [dim, B]
    dense_t = jnp.concatenate(dense_rows, axis=0) if dense_rows else None

    if sparse_t is None and dense_t is None:
        return jnp.zeros((B, 1), jnp.float32)

    refine_t = None
    if sparse_feat_refine_weight is not None and sparse_t is not None:
        refine_t = sparse_feat_refine_weight.astype(jnp.float32).T  # [nS, B]

    use_pallas = force_pallas or (B >= min_pallas_batch)

    if refine_t is None:
        # Fused single-stream path: one [F, B] tensor + one resident [F, 1] scale.
        parts, scales = [], []
        if sparse_t is not None:
            parts.append(sparse_t)
            scales.append(jnp.ones((sparse_t.shape[0],), jnp.float32))
        if dense_t is not None:
            parts.append(dense_t)
            scales.append(dense_weight.astype(jnp.float32).reshape(-1))
        feat_t = parts[0] if len(parts) == 1 else jnp.concatenate(parts, axis=0)
        scale = jnp.concatenate(scales, axis=0)[:, None]     # [F, 1]
        if use_pallas:
            out = _fused_logit_pallas(feat_t, scale, block_b)
        else:
            out = jnp.sum(feat_t * scale, axis=0, keepdims=True)
    else:
        if dense_t is None:
            dense_t = jnp.zeros((1, B), jnp.float32)
            w = jnp.zeros((1, 1), jnp.float32)
        else:
            w = dense_weight.astype(jnp.float32).reshape(-1, 1)
        if use_pallas:
            out = _refine_logit_pallas(sparse_t, refine_t, dense_t, w, block_b)
        else:
            out = (jnp.sum(sparse_t * refine_t, axis=0, keepdims=True)
                   + jnp.sum(dense_t * w, axis=0, keepdims=True))

    return out.reshape(B, 1)   # [1, B] -> [B, 1] (same linear order, pure reshape)


# ---------------------------------------------------------------------------
# Demo + correctness check
# ---------------------------------------------------------------------------
def _reference_logit(X, feature_index, sparse_feats, dense_feats,
                     embedding_tables, dense_weight, refine=None):
    sp = jnp.stack(
        [embedding_tables[n][X[:, feature_index[n][0]].astype(jnp.int32), 0]
         for n in sparse_feats], axis=-1)                        # [B, nS]
    if refine is not None:
        sp = sp * refine
    de = jnp.concatenate(
        [X[:, feature_index[n][0]:feature_index[n][1]] for n, _ in dense_feats],
        axis=-1)                                                 # [B, D]
    return jnp.sum(sp, axis=-1, keepdims=True) + de @ dense_weight


def _make_inputs(key, B, sparse_feats, sparse_vocab, dense_feats, feature_index,
                 total_cols, D_dense, init_std=0.0001):
    keys = jax.random.split(key, 4 + len(sparse_feats))
    embedding_tables = {
        name: init_std * jax.random.normal(k, (sparse_vocab[name], 1), jnp.float32)
        for name, k in zip(sparse_feats, keys[:len(sparse_feats)])
    }
    dense_weight = init_std * jax.random.normal(
        keys[len(sparse_feats)], (D_dense, 1), jnp.float32)
    kid, kval, kref = keys[len(sparse_feats) + 1:len(sparse_feats) + 4]
    X = jnp.zeros((B, total_cols), jnp.float32)
    for name in sparse_feats:
        s, _ = feature_index[name]
        ids = jax.random.randint(jax.random.fold_in(kid, s), (B,),
                                 0, sparse_vocab[name]).astype(jnp.float32)
        X = X.at[:, s].set(ids)
    dense_part = jax.random.normal(kval, (B, D_dense), jnp.float32)
    X = X.at[:, len(sparse_feats):].set(dense_part)
    refine = 1.0 + 0.1 * jax.random.normal(kref, (B, len(sparse_feats)), jnp.float32)
    return embedding_tables, dense_weight, X, refine


if __name__ == "__main__":
    key = jax.random.PRNGKey(0)

    # synthetic feature config (like SparseFeat / DenseFeat lists)
    sparse_feats = ["C1", "C2", "C3"]
    sparse_vocab = {"C1": 10, "C2": 20, "C3": 30}
    dense_feats = [("D1", 4), ("D2", 2)]          # (name, dimension)
    D_dense = sum(d for _, d in dense_feats)      # 6

    feature_index, col = {}, 0
    for name in sparse_feats:
        feature_index[name] = (col, col + 1); col += 1
    for name, dim in dense_feats:
        feature_index[name] = (col, col + dim); col += dim
    total_cols = col                               # 9

    ok = True

    # --- 1) small batch, fused no-refine kernel (single full-extent block) ---
    B = 8
    emb, W, X, refine = _make_inputs(key, B, sparse_feats, sparse_vocab,
                                     dense_feats, feature_index, total_cols, D_dense)
    out = linear_forward(X, feature_index, sparse_feats, dense_feats, emb, W,
                         force_pallas=True)
    out = jax.block_until_ready(out)
    ref = _reference_logit(X, feature_index, sparse_feats, dense_feats, emb, W)
    ok &= out.shape == (B, 1)
    ok &= np.allclose(np.asarray(out), np.asarray(ref), rtol=1e-5, atol=1e-6)

    # --- 2) refine-weight kernel path ---
    out_r = linear_forward(X, feature_index, sparse_feats, dense_feats, emb, W,
                           sparse_feat_refine_weight=refine, force_pallas=True)
    out_r = jax.block_until_ready(out_r)
    ref_r = _reference_logit(X, feature_index, sparse_feats, dense_feats, emb, W,
                             refine=refine)
    ok &= np.allclose(np.asarray(out_r), np.asarray(ref_r), rtol=1e-5, atol=1e-6)

    # --- 3) tiled + padded path (B not a multiple of the tile) ---
    B2 = 400
    emb2, W2, X2, _ = _make_inputs(jax.random.PRNGKey(1), B2, sparse_feats,
                                   sparse_vocab, dense_feats, feature_index,
                                   total_cols, D_dense)
    out2 = linear_forward(X2, feature_index, sparse_feats, dense_feats, emb2, W2,
                          block_b=128, force_pallas=True)   # grid of 4, pad 400->512
    out2 = jax.block_until_ready(out2)
    ref2 = _reference_logit(X2, feature_index, sparse_feats, dense_feats, emb2, W2)
    ok &= out2.shape == (B2, 1)
    ok &= np.allclose(np.asarray(out2), np.asarray(ref2), rtol=1e-5, atol=1e-6)

    # --- 4) small-batch jnp bypass (no Pallas) still matches ---
    out_b = jax.block_until_ready(
        linear_forward(X, feature_index, sparse_feats, dense_feats, emb, W))
    ok &= np.allclose(np.asarray(out_b), np.asarray(ref), rtol=1e-5, atol=1e-6)

    if ok:
        print("KERNEL_OK")
</pallas_src>

<mosaic_0001>
module attributes {stable_mosaic.version = 11 : i64} {
  func.func @_fused_logit_kernel(%arg0: i32, %arg1: memref<9x8xf32, #tpu.memory_space<vmem>>, %arg2: memref<9x1xf32, #tpu.memory_space<vmem>>, %arg3: memref<1x8xf32, #tpu.memory_space<vmem>>) attributes {dimension_semantics = [#tpu.dimension_semantics<parallel>], iteration_bounds = array<i64: 1>, scalar_prefetch = 0 : i64, scratch_operands = 0 : i64, tpu.core_type = #tpu.core_type<tc>, window_params = [{transform_indices = @transform_0, window_bounds = array<i64: 9, 8>}, {pipeline_mode = #tpu.pipeline_mode<synchronous>, transform_indices = @transform_1, window_bounds = array<i64: 9, 1>}, {transform_indices = @transform_2, window_bounds = array<i64: 1, 8>}]} {
    %c0 = arith.constant 0 : index
    %c0_0 = arith.constant 0 : index
    %0 = vector.load %arg1[%c0, %c0_0] : memref<9x8xf32, #tpu.memory_space<vmem>>, vector<9x8xf32>
    %c0_1 = arith.constant 0 : index
    %c0_2 = arith.constant 0 : index
    %1 = vector.load %arg2[%c0_1, %c0_2] : memref<9x1xf32, #tpu.memory_space<vmem>>, vector<9x1xf32>
    %2 = vector.broadcast %1 : vector<9x1xf32> to vector<9x8xf32>
    %3 = arith.mulf %0, %2 : vector<9x8xf32>
    %cst = arith.constant dense<0.000000e+00> : vector<8xf32>
    %4 = vector.multi_reduction <add>, %3, %cst [0] : vector<9x8xf32> to vector<8xf32>
    %5 = vector.shape_cast %4 : vector<8xf32> to vector<1x8xf32>
    %c0_3 = arith.constant 0 : index
    %c0_4 = arith.constant 0 : index
    %6 = vector.load %arg3[%c0_3, %c0_4] : memref<1x8xf32, #tpu.memory_space<vmem>>, vector<1x8xf32>
    tpu.vector_store %arg3[%c0_3, %c0_4], %5 {strides = array<i32>} : memref<1x8xf32, #tpu.memory_space<vmem>>, vector<1x8xf32>,
    return
  }
  func.func @transform_0(%arg0: i32) -> (i32, i32) {
    %c0_i32 = arith.constant 0 : i32
    %c0_i32_0 = arith.constant 0 : i32
    return %c0_i32, %arg0 : i32, i32
  }
  func.func @transform_1(%arg0: i32) -> (i32, i32) {
    %c0_i32 = arith.constant 0 : i32
    %c0_i32_0 = arith.constant 0 : i32
    %c0_i32_1 = arith.constant 0 : i32
    return %c0_i32, %c0_i32_0 : i32, i32
  }
  func.func @transform_2(%arg0: i32) -> (i32, i32) {
    %c0_i32 = arith.constant 0 : i32
    %c0_i32_0 = arith.constant 0 : i32
    return %c0_i32, %arg0 : i32, i32
  }
}

</mosaic_0001>

<llo_original>
// kernel: tpu_custom_call.1
$region0: #{tpu_custom_call.1}
  #allocation0 [shape = 'u32[]', space=smem, size = 0x4, offset = 0x4, fixed_abs, tag = 'smem constant byte address 0x4 - core index']
  #allocation1 [shape = 'u32[72,128]{1,0:T(1,128)}', space=vmem, size = 0x9000, scoped, tag = 'internal scratch']
  %s0 = inlined_call_operand.vmem [shape: f32[9,8], index: 0, kind: input, shape index: {}]
  %s1 = inlined_call_operand.vmem [shape: f32[9,1], index: 1, kind: input, shape index: {}]
  %s2 = inlined_call_operand.hbm [shape: f32[1,8], index: 2, kind: output, shape index: {}]
  %s3 = sld [smem:[#allocation0]]
  $region18: #{tpu_custom_call.1} parent=0
    _
  %s5 = ssub.s32 1, %s3
  %s6 = scalar_select 0, %s5, %s3
  $region1: #{tpu_custom_call.1} parent=0
    #allocation2 [shape = 'u8[512]{0}', space=vmem, size = 0x400, scoped, tag = 'output window, operand 0, single buffered']
    #allocation3 [shape = 's32[1]{0}', space=sflag, size = 0x4, scoped, tag = 'scoped memory for tpu_custom_call.1']
    %7 = vsyncpa [#allocation3], 0
    // Predicated region
    $region2: #{tpu_custom_call.1} parent=1 // pred_check
      _
    $region3: #{tpu_custom_call.1} parent=1 // pred_check_branch
      %9 = sbr.rel (0) target = $region5
    $region4: #{tpu_custom_call.1} parent=1 // pred_region
      _
    $region5: #{tpu_custom_call.1} parent=1 // pred_fallthru
      _
    // Predicated region
    $region6: #{tpu_custom_call.1} parent=1 // pred_check
      _
    $region7: #{tpu_custom_call.1} parent=1 // pred_check_branch
      %11 = sbr.rel (0) target = $region9
    $region8: #{tpu_custom_call.1} parent=1 // pred_region
      _
    $region9: #{tpu_custom_call.1} parent=1 // pred_fallthru
      _
    %v12 = vld [vmem:[%s0] sm:$0xff]
    %v13 = vld [vmem:[%s0 + $0x8] sm:$0x1]
    %v14 = vld [vmem:[%s1] sm:$0xff]
    %v15 = vld [vmem:[%s1 + $0x8] sm:$0x1]
    %17 = vset.pattern.permute.xlu0 0
    %18 = vperm.xlu0 %17, %v14
    %v19 = vpop.permute.xlu0 %18
    %22 = vset.pattern.permute.xlu0 0
    %23 = vperm.xlu0 %22, %v15
    %v24 = vpop.permute.xlu0 %23
    %v26 = vmul.f32 %v12, %v19
    %v27 = vmul.f32 %v13, %v24
    %vm28 = vcmask 64512
    %v29 = vsel %vm28, %v26, 0.0
    %vm30 = vcmask 57344
    %v31 = vsel %vm30, %v27, 0.0
    %v32 = vadd.f32 %v29, %v31
    %v33 = vrot.slane %v32, 4
    %v34 = vadd.f32 %v32, %v33
    %v35 = vrot.slane %v34, 2
    %v36 = vadd.f32 %v34, %v35
    %v37 = vrot.slane %v36, 1
    %v38 = vadd.f32 %v36, %v37
    %39 = vst.msk [vmem:[#allocation2] sm:$0x1] %vm30, %v38
    // Predicated region
    $region10: #{tpu_custom_call.1} parent=1 // pred_check
      _
    $region11: #{tpu_custom_call.1} parent=1 // pred_check_branch
      %41 = sbr.rel (0) target = $region13
    $region12: #{tpu_custom_call.1} parent=1 // pred_region
      %43 = vsyncadd [#allocation3], 0
      %s45 = sshll.u32 [#allocation2], 4
      %s46 = int_to_ptr.vmem [resolvable:$true] %s45
      %s47 = sshll.u32 %s2, 4
      %s48 = int_to_ptr.hbm [resolvable:$true] %s47
      %50 = dma.vmem_to_hbm [thread:$0]  %s46, 16, %s48, [#allocation3]
    $region13: #{tpu_custom_call.1} parent=1 // pred_fallthru
      _
    // Predicated region
    $region14: #{tpu_custom_call.1} parent=1 // pred_check
      _
    $region15: #{tpu_custom_call.1} parent=1 // pred_check_branch
      %52 = sbr.rel (0) target = $region17
    $region16: #{tpu_custom_call.1} parent=1 // pred_region
      %54 = dma.done [#allocation3], 16
    $region17: #{tpu_custom_call.1} parent=1 // pred_fallthru
      _
    %55 = vsyncpa [#allocation3], 1

</llo_original>
